<compile_context>
chip_gen: v7x
topology: tpu7x:2x2x1
jax: 0.10.0
libtpu: 0.0.40
codegen_flags: <defaults>
</compile_context>

<pallas_src>
import jax
import jax.numpy as jnp
import numpy as np
from jax.experimental import pallas as pl
from jax.experimental.pallas import tpu as pltpu


# ----------------------------------------------------------------------------
# Fused kernel: synthetic conditioned model + CFG mix (pre-matmul form).
# One grid step processes `block_b` batch elements.
# ----------------------------------------------------------------------------
def _cfg_model_kernel(s_ref, x_ref, temb_ref, cemb_ref, mpack_ref,
                      w1_ref, b1_ref, o_ref):
    s = s_ref[0]                                     # SMEM scalar cfg_scale
    bN, T, D = x_ref.shape

    msk = mpack_ref[:, :, 0:1]                       # (bN, T, 1)  mask
    cmsk = mpack_ref[:, :, 1:2]                      # (bN, T, 1)  cond_mask

    # CFG algebra folded before the matmul:
    #   s*h_c + (1-s)*h_u = (x + t_emb)*(mask - (1-s)*cmask)
    #                       + c_emb * (s*cmask*mask)
    a_coef = msk - (1.0 - s) * cmsk
    c_coef = s * (cmsk * msk)

    base = x_ref[...] + temb_ref[...]                # (bN,T,D) + (bN,1,D)
    h_mix = base * a_coef + cemb_ref[...] * c_coef   # (bN,T,D) f32

    # Single MXU contraction per grid step, bf16 inputs / f32 accumulate.
    out = jnp.dot(h_mix.reshape(bN * T, D).astype(jnp.bfloat16),
                  w1_ref[...],                       # already bf16
                  preferred_element_type=jnp.float32)
    out = out + b1_ref[...]                          # bias once (s + (1-s) = 1)
    o_ref[...] = out.reshape(bN, T, D).astype(o_ref.dtype)


# ----------------------------------------------------------------------------
# Block sizing helpers
# ----------------------------------------------------------------------------
def _num_tensorcores():
    """Best-effort TensorCores per device (2 on v7x-class parts, else 1)."""
    try:
        d = jax.devices()[0]
        for attr in ("num_cores", "core_count"):
            n = getattr(d, attr, None)
            if isinstance(n, int) and n > 0:
                return int(n)
    except Exception:
        pass
    return 1


def _block_vmem_bytes(block_b, T, D):
    """Rough VMEM footprint of one grid step (double-buffered blocks)."""
    f32, bf16 = 4, 2
    x_blk = block_b * T * D * f32
    o_blk = block_b * T * D * f32
    emb_blk = 2 * block_b * 8 * D * f32           # temb + cemb (sublane-padded)
    msk_blk = block_b * T * 128 * f32             # (T,2) lane-pads to 128
    w_blk = D * D * bf16 + 8 * D * f32            # W1 + b1 (padded)
    return 2 * (x_blk + o_blk + emb_blk + msk_blk + w_blk)


def _choose_block_b(B, T, D, *, target_rows=512,
                    vmem_budget_bytes=24 * 2**20, min_grid_steps=1):
    """Largest divisor of B that fits the VMEM budget, aiming at ~target_rows
    MXU rows per step and keeping >= min_grid_steps grid steps when possible."""
    divisors = [d for d in range(1, B + 1) if B % d == 0]
    fitting = [d for d in divisors
               if _block_vmem_bytes(d, T, D) <= vmem_budget_bytes] or [1]
    pool = [d for d in fitting if B // d >= min_grid_steps] or fitting
    want = max(1, target_rows // max(T, 1))
    le = [d for d in sorted(pool) if d <= want]
    return le[-1] if le else min(pool)


# ----------------------------------------------------------------------------
# Wrapper: hoist batch-level embeddings, pack masks, launch the fused kernel.
# ----------------------------------------------------------------------------
def cfg_fused_forward(x, timesteps, cond, mask, cond_mask, params, cfg_scale,
                      block_b=None):
    """Fused CFG forward of the synthetic wrapped model.

    x: (B,T,D)  timesteps: (B,)  cond: (B,C)  mask/cond_mask: (B,T)
    Returns (B,T,D) = s*model(cond branch) + (1-s)*model(uncond branch).
    """
    B, T, D = x.shape
    wt, wc, w1, b1 = params

    # Batch-level model embeddings hoisted out of the kernel: one (B,C)x(C,D)
    # GEMM and one broadcast multiply for the WHOLE batch, instead of a tiny
    # MXU push + Wc DMA per grid step.
    temb = (timesteps.astype(jnp.float32).reshape(B, 1) * wt).reshape(B, 1, D)
    cemb = jnp.dot(cond.astype(jnp.float32), wc).reshape(B, 1, D)

    # Single packed mask stream (mask, cond_mask) on the lane dim.
    mpack = jnp.stack(
        [mask.astype(jnp.float32), cond_mask.astype(jnp.float32)], axis=-1)

    # bf16 weights for the MXU; bias stays f32 (added after the f32 accumulate).
    w1_bf16 = w1.astype(jnp.bfloat16)
    b1_f32 = b1.astype(jnp.float32)

    if block_b is None:
        cores = _num_tensorcores()
        # Single-TC (v5e/v6e): largest fitting block, grid may be 1 step.
        # Multi-TC (v7x): keep >=2 steps per core so DMA overlaps compute.
        min_steps = 2 * cores if cores > 1 else 1
        block_b = _choose_block_b(B, T, D, min_grid_steps=min_steps)
    assert B % block_b == 0, (B, block_b)
    grid_b = B // block_b

    vmem_limit = int(min(max(2 * _block_vmem_bytes(block_b, T, D), 32 * 2**20),
                         64 * 2**20))

    s_arr = jnp.asarray([cfg_scale], dtype=jnp.float32)

    # TODO(synk): at production D, mark the grid-invariant weight specs
    # pipeline_mode=pl.Buffered(1) (or stage them into VMEM scratch) so they
    # are not double-buffered under v7x's 64 MiB VMEM; negligible at D=128.
    # TODO(synk): emit bf16 output (out_shape dtype) if the consumer tolerates
    # it to halve the output HBM writeback.
    return pl.pallas_call(
        _cfg_model_kernel,
        out_shape=jax.ShapeDtypeStruct((B, T, D), x.dtype),
        grid_spec=pltpu.PrefetchScalarGridSpec(
            num_scalar_prefetch=0,
            grid=(grid_b,),
            in_specs=[
                pl.BlockSpec(memory_space=pltpu.MemorySpace.SMEM),   # cfg scale
                pl.BlockSpec((block_b, T, D), lambda i: (i, 0, 0)),  # x
                pl.BlockSpec((block_b, 1, D), lambda i: (i, 0, 0)),  # t*wt emb
                pl.BlockSpec((block_b, 1, D), lambda i: (i, 0, 0)),  # cond@Wc emb
                pl.BlockSpec((block_b, T, 2), lambda i: (i, 0, 0)),  # packed masks
                pl.BlockSpec((D, D), lambda i: (0, 0)),              # W1 (bf16)
                pl.BlockSpec((1, D), lambda i: (0, 0)),              # b1
            ],
            out_specs=pl.BlockSpec((block_b, T, D), lambda i: (i, 0, 0)),
        ),
        compiler_params=pltpu.CompilerParams(
            dimension_semantics=("parallel",),
            vmem_limit_bytes=vmem_limit),
    )(s_arr, x, temb, cemb, mpack, w1_bf16, b1_f32)


# ----------------------------------------------------------------------------
# Module-level wrappers
# ----------------------------------------------------------------------------
class SyntheticModel:
    """Stand-in for the arbitrary wrapped nn.Module (holds its parameters)."""

    def __init__(self, params):
        self.params = params  # (wt, wc, w1, b1)


class ClassifierFreeSampleModel:
    """CFG wrapper. The synthetic wrapped model and the CFG mix are fused into
    a single Pallas kernel (no 2B batch duplication, no second pass). A truly
    black-box wrapped model would require the duplicated-batch path."""

    def __init__(self, model, cfg_scale):
        self.model = model
        self.s = cfg_scale

    def __call__(self, x, timesteps, cond=None, mask=None, cond_mask=None):
        # TODO(synk): cond/mask/cond_mask == None branches of the original
        # wrapper are not implemented (the synthetic model requires them).
        assert cond is not None and mask is not None and cond_mask is not None
        return cfg_fused_forward(x, timesteps, cond, mask, cond_mask,
                                 self.model.params, self.s)


# ----------------------------------------------------------------------------
# Pure-JAX reference: the faithful PyTorch path (duplicate batch, zero uncond
# cond, uncond_mask = mask - cond_mask, run model on 2B, slice, mix) in f32.
# ----------------------------------------------------------------------------
def ref_inner_model(x, t, cond, mask, cond_mask, params):
    wt, wc, w1, b1 = params
    t_emb = t.astype(jnp.float32)[:, None, None] * wt[None]          # (N,1,D)
    c_emb = (cond @ wc)[:, None, :]                                   # (N,1,D)
    h = x + t_emb + c_emb * cond_mask[:, :, None]
    h = h * mask[:, :, None]
    return h @ w1 + b1[None]


def ref_cfg_forward(x, timesteps, cond, mask, cond_mask, params, s):
    B = x.shape[0]
    x_c = jnp.concatenate([x, x], axis=0)
    t_c = jnp.concatenate([timesteps, timesteps], axis=0)
    cond_c = jnp.concatenate([cond, jnp.zeros_like(cond)], axis=0)
    uncond_mask = mask - cond_mask
    mask_c = jnp.concatenate([mask, uncond_mask], axis=0)
    cmask_c = jnp.concatenate([cond_mask, cond_mask], axis=0)
    out = ref_inner_model(x_c, t_c, cond_c, mask_c, cmask_c, params)
    return s * out[:B] + (1.0 - s) * out[B:]


if __name__ == "__main__":
    # Small but MXU-meaningful shapes: lane-dense D=128, full-batch block
    # (256 MXU rows) on single-TC chips.
    B, T, D, C = 16, 16, 128, 64
    cfg_scale = 2.5

    key = jax.random.PRNGKey(0)
    kx, kc, kwt, kwc, kw1, kb1, km1, km2 = jax.random.split(key, 8)

    x = jax.random.normal(kx, (B, T, D), dtype=jnp.float32)
    timesteps = (jnp.arange(B, dtype=jnp.float32) + 1.0) / B
    cond = jax.random.normal(kc, (B, C), dtype=jnp.float32)
    mask = (jax.random.uniform(km1, (B, T)) > 0.1).astype(jnp.float32)
    cond_mask = mask * (jax.random.uniform(km2, (B, T)) > 0.5).astype(jnp.float32)

    # Deterministic synthetic parameters for the wrapped model.
    wt = 0.1 * jax.random.normal(kwt, (1, D), dtype=jnp.float32)
    wc = 0.1 * jax.random.normal(kwc, (C, D), dtype=jnp.float32)
    w1 = 0.05 * jax.random.normal(kw1, (D, D), dtype=jnp.float32)
    b1 = 0.1 * jax.random.normal(kb1, (1, D), dtype=jnp.float32)
    params = (wt, wc, w1, b1)

    model = ClassifierFreeSampleModel(SyntheticModel(params), cfg_scale)
    out = model(x, timesteps, cond=cond, mask=mask, cond_mask=cond_mask)
    out = jax.block_until_ready(out)

    ref = ref_cfg_forward(x, timesteps, cond, mask, cond_mask, params, cfg_scale)
    # bf16 MXU inputs (and pre-matmul mixing) vs. the f32 reference -> loosen
    # tolerances per the review; structural errors would be orders larger.
    np.testing.assert_allclose(np.asarray(out), np.asarray(ref),
                               rtol=3e-2, atol=5e-2)

    print("KERNEL_OK")
</pallas_src>

<mosaic_0001>
module attributes {stable_mosaic.version = 11 : i64} {
  func.func @_cfg_model_kernel(%arg0: i32, %arg1: memref<1xf32, #tpu.memory_space<smem>>, %arg2: memref<16x16x128xf32, #tpu.memory_space<vmem>>, %arg3: memref<16x1x128xf32, #tpu.memory_space<vmem>>, %arg4: memref<16x1x128xf32, #tpu.memory_space<vmem>>, %arg5: memref<16x16x2xf32, #tpu.memory_space<vmem>>, %arg6: memref<128x128xbf16, #tpu.memory_space<vmem>>, %arg7: memref<1x128xf32, #tpu.memory_space<vmem>>, %arg8: memref<16x16x128xf32, #tpu.memory_space<vmem>>) attributes {dimension_semantics = [#tpu.dimension_semantics<parallel>], iteration_bounds = array<i64: 1>, scalar_prefetch = 0 : i64, scratch_operands = 0 : i64, tpu.core_type = #tpu.core_type<tc>, window_params = [{transform_indices = @transform_0, window_bounds = array<i64: 1>}, {transform_indices = @transform_1, window_bounds = array<i64: 16, 16, 128>}, {transform_indices = @transform_2, window_bounds = array<i64: 16, 1, 128>}, {transform_indices = @transform_3, window_bounds = array<i64: 16, 1, 128>}, {transform_indices = @transform_4, window_bounds = array<i64: 16, 16, 2>}, {pipeline_mode = #tpu.pipeline_mode<synchronous>, transform_indices = @transform_5, window_bounds = array<i64: 128, 128>}, {pipeline_mode = #tpu.pipeline_mode<synchronous>, transform_indices = @transform_6, window_bounds = array<i64: 1, 128>}, {transform_indices = @transform_7, window_bounds = array<i64: 16, 16, 128>}]} {
    %c0 = arith.constant 0 : index
    %0 = memref.load %arg1[%c0] : memref<1xf32, #tpu.memory_space<smem>>
    %c0_0 = arith.constant 0 : index
    %c0_1 = arith.constant 0 : index
    %c0_2 = arith.constant 0 : index
    %1 = vector.load %arg5[%c0_0, %c0_1, %c0_2] : memref<16x16x2xf32, #tpu.memory_space<vmem>>, vector<16x16x1xf32>
    %c0_3 = arith.constant 0 : index
    %c0_4 = arith.constant 0 : index
    %c1 = arith.constant 1 : index
    %2 = vector.load %arg5[%c0_3, %c0_4, %c1] : memref<16x16x2xf32, #tpu.memory_space<vmem>>, vector<16x16x1xf32>
    %cst = arith.constant 1.000000e+00 : f32
    %3 = arith.subf %cst, %0 : f32
    %4 = vector.broadcast %3 : f32 to vector<16x16x1xf32>
    %5 = arith.mulf %4, %2 : vector<16x16x1xf32>
    %6 = arith.subf %1, %5 : vector<16x16x1xf32>
    %7 = arith.mulf %2, %1 : vector<16x16x1xf32>
    %8 = vector.broadcast %0 : f32 to vector<16x16x1xf32>
    %9 = arith.mulf %8, %7 : vector<16x16x1xf32>
    %c0_5 = arith.constant 0 : index
    %c0_6 = arith.constant 0 : index
    %c0_7 = arith.constant 0 : index
    %10 = vector.load %arg2[%c0_5, %c0_6, %c0_7] : memref<16x16x128xf32, #tpu.memory_space<vmem>>, vector<16x16x128xf32>
    %c0_8 = arith.constant 0 : index
    %c0_9 = arith.constant 0 : index
    %c0_10 = arith.constant 0 : index
    %11 = vector.load %arg3[%c0_8, %c0_9, %c0_10] : memref<16x1x128xf32, #tpu.memory_space<vmem>>, vector<16x1x128xf32>
    %12 = vector.broadcast %11 : vector<16x1x128xf32> to vector<16x16x128xf32>
    %13 = arith.addf %10, %12 : vector<16x16x128xf32>
    %14 = vector.broadcast %6 : vector<16x16x1xf32> to vector<16x16x128xf32>
    %15 = arith.mulf %13, %14 : vector<16x16x128xf32>
    %c0_11 = arith.constant 0 : index
    %c0_12 = arith.constant 0 : index
    %c0_13 = arith.constant 0 : index
    %16 = vector.load %arg4[%c0_11, %c0_12, %c0_13] : memref<16x1x128xf32, #tpu.memory_space<vmem>>, vector<16x1x128xf32>
    %17 = vector.broadcast %16 : vector<16x1x128xf32> to vector<16x16x128xf32>
    %18 = vector.broadcast %9 : vector<16x16x1xf32> to vector<16x16x128xf32>
    %19 = arith.mulf %17, %18 : vector<16x16x128xf32>
    %20 = arith.addf %15, %19 : vector<16x16x128xf32>
    %21 = vector.shape_cast %20 : vector<16x16x128xf32> to vector<256x128xf32>
    %22 = arith.truncf %21 : vector<256x128xf32> to vector<256x128xbf16>
    %c0_14 = arith.constant 0 : index
    %c0_15 = arith.constant 0 : index
    %23 = vector.load %arg6[%c0_14, %c0_15] : memref<128x128xbf16, #tpu.memory_space<vmem>>, vector<128x128xbf16>
    %cst_16 = arith.constant dense<0.000000e+00> : vector<256x128xf32>
    %24 = tpu.matmul %22, %23, %cst_16 {dimension_numbers = #tpu.dot_dimension_numbers<[1], [0], [0], [1], [0, 0, 1, 1], [], []>} : vector<256x128xbf16>, vector<128x128xbf16>, vector<256x128xf32> -> vector<256x128xf32>
    %c0_17 = arith.constant 0 : index
    %c0_18 = arith.constant 0 : index
    %25 = vector.load %arg7[%c0_17, %c0_18] : memref<1x128xf32, #tpu.memory_space<vmem>>, vector<1x128xf32>
    %26 = vector.broadcast %25 : vector<1x128xf32> to vector<256x128xf32>
    %27 = arith.addf %24, %26 : vector<256x128xf32>
    %28 = vector.shape_cast %27 : vector<256x128xf32> to vector<16x16x128xf32>
    %c0_19 = arith.constant 0 : index
    %c0_20 = arith.constant 0 : index
    %c0_21 = arith.constant 0 : index
    %29 = vector.load %arg8[%c0_19, %c0_20, %c0_21] : memref<16x16x128xf32, #tpu.memory_space<vmem>>, vector<16x16x128xf32>
    tpu.vector_store %arg8[%c0_19, %c0_20, %c0_21], %28 {strides = array<i32>} : memref<16x16x128xf32, #tpu.memory_space<vmem>>, vector<16x16x128xf32>,
    return
  }
  func.func @transform_0(%arg0: i32) -> i32 {
    %c0_i32 = arith.constant 0 : i32
    %c0_i32_0 = arith.constant 0 : i32
    return %c0_i32 : i32
  }
  func.func @transform_1(%arg0: i32) -> (i32, i32, i32) {
    %c0_i32 = arith.constant 0 : i32
    %c0_i32_0 = arith.constant 0 : i32
    %c0_i32_1 = arith.constant 0 : i32
    return %arg0, %c0_i32, %c0_i32_0 : i32, i32, i32
  }
  func.func @transform_2(%arg0: i32) -> (i32, i32, i32) {
    %c0_i32 = arith.constant 0 : i32
    %c0_i32_0 = arith.constant 0 : i32
    %c0_i32_1 = arith.constant 0 : i32
    return %arg0, %c0_i32, %c0_i32_0 : i32, i32, i32
  }
  func.func @transform_3(%arg0: i32) -> (i32, i32, i32) {
    %c0_i32 = arith.constant 0 : i32
    %c0_i32_0 = arith.constant 0 : i32
    %c0_i32_1 = arith.constant 0 : i32
    return %arg0, %c0_i32, %c0_i32_0 : i32, i32, i32
  }
  func.func @transform_4(%arg0: i32) -> (i32, i32, i32) {
    %c0_i32 = arith.constant 0 : i32
    %c0_i32_0 = arith.constant 0 : i32
    %c0_i32_1 = arith.constant 0 : i32
    return %arg0, %c0_i32, %c0_i32_0 : i32, i32, i32
  }
  func.func @transform_5(%arg0: i32) -> (i32, i32) {
    %c0_i32 = arith.constant 0 : i32
    %c0_i32_0 = arith.constant 0 : i32
    %c0_i32_1 = arith.constant 0 : i32
    return %c0_i32, %c0_i32_0 : i32, i32
  }
  func.func @transform_6(%arg0: i32) -> (i32, i32) {
    %c0_i32 = arith.constant 0 : i32
    %c0_i32_0 = arith.constant 0 : i32
    %c0_i32_1 = arith.constant 0 : i32
    return %c0_i32, %c0_i32_0 : i32, i32
  }
  func.func @transform_7(%arg0: i32) -> (i32, i32, i32) {
    %c0_i32 = arith.constant 0 : i32
    %c0_i32_0 = arith.constant 0 : i32
    %c0_i32_1 = arith.constant 0 : i32
    return %arg0, %c0_i32, %c0_i32_0 : i32, i32, i32
  }
}

</mosaic_0001>

<llo_original>
// kernel: tpu_custom_call.1
$region0: #{tpu_custom_call.1}
  #allocation0 [shape = 'u32[]', space=smem, size = 0x4, offset = 0x4, fixed_abs, tag = 'smem constant byte address 0x4 - core index']
  #allocation1 [shape = 'u32[144,128]{1,0:T(1,128)}', space=vmem, size = 0x12000, scoped, tag = 'internal scratch']
  #allocation2 [shape = 'f32[1]{0:T(128)S(6)}', space=smem, size = 0x200, scoped, tag = 'scoped memory for tpu_custom_call.1']
  %s0 = inlined_call_operand.<no memory space> [shape: f32[1], index: 0, kind: input, shape index: {}]
  %s1 = inlined_call_operand.vmem [shape: f32[16,16,128], index: 1, kind: input, shape index: {}]
  %s2 = inlined_call_operand.vmem [shape: f32[16,1,128], index: 2, kind: input, shape index: {}]
  %s3 = inlined_call_operand.vmem [shape: f32[16,1,128], index: 3, kind: input, shape index: {}]
  %s4 = inlined_call_operand.vmem [shape: f32[16,16,2], index: 4, kind: input, shape index: {}]
  %s5 = inlined_call_operand.hbm [shape: bf16[128,128], index: 5, kind: input, shape index: {}]
  %s6 = inlined_call_operand.vmem [shape: f32[1,128], index: 6, kind: input, shape index: {}]
  %s7 = inlined_call_operand.hbm [shape: f32[16,16,128], index: 7, kind: output, shape index: {}]
  %s8 = sld [smem:[#allocation0]]
  $region42: #{tpu_custom_call.1} parent=0
    _
  %s10 = ssub.s32 1, %s8
  %s11 = scalar_select 0, %s10, %s8
  %12 = sst [smem:[#allocation2]] %s0
  $region1: #{tpu_custom_call.1} parent=0
    #allocation3 [shape = 'u8[32768]{0}', space=vmem, size = 0x8000, scoped, tag = 'input window, operand 5, single buffered']
    #allocation4 [shape = 's32[1]{0}', space=sflag, size = 0x4, scoped, tag = 'scoped memory for tpu_custom_call.1']
    #allocation5 [shape = 's32[1]{0}', space=sflag, size = 0x4, scoped, tag = 'scoped memory for tpu_custom_call.1']
    #allocation6 [shape = 'u8[131072]{0}', space=vmem, size = 0x20000, scoped, tag = 'output window, operand 0, single buffered']
    %13 = vsyncpa [#allocation4], 0
    %14 = vsyncpa [#allocation5], 0
    // Predicated region
    $region2: #{tpu_custom_call.1} parent=1 // pred_check
      _
    $region3: #{tpu_custom_call.1} parent=1 // pred_check_branch
      %16 = sbr.rel (0) target = $region5
    $region4: #{tpu_custom_call.1} parent=1 // pred_region
      _
    $region5: #{tpu_custom_call.1} parent=1 // pred_fallthru
      _
    // Predicated region
    $region6: #{tpu_custom_call.1} parent=1 // pred_check
      _
    $region7: #{tpu_custom_call.1} parent=1 // pred_check_branch
      %18 = sbr.rel (0) target = $region9
    $region8: #{tpu_custom_call.1} parent=1 // pred_region
      _
    $region9: #{tpu_custom_call.1} parent=1 // pred_fallthru
      _
    // Predicated region
    $region10: #{tpu_custom_call.1} parent=1 // pred_check
      _
    $region11: #{tpu_custom_call.1} parent=1 // pred_check_branch
      %20 = sbr.rel (0) target = $region13
    $region12: #{tpu_custom_call.1} parent=1 // pred_region
      _
    $region13: #{tpu_custom_call.1} parent=1 // pred_fallthru
      _
    // Predicated region
    $region14: #{tpu_custom_call.1} parent=1 // pred_check
      _
    $region15: #{tpu_custom_call.1} parent=1 // pred_check_branch
      %22 = sbr.rel (0) target = $region17
    $region16: #{tpu_custom_call.1} parent=1 // pred_region
      _
    $region17: #{tpu_custom_call.1} parent=1 // pred_fallthru
      _
    // Predicated region
    $region18: #{tpu_custom_call.1} parent=1 // pred_check
      _
    $region19: #{tpu_custom_call.1} parent=1 // pred_check_branch
      %24 = sbr.rel (0) target = $region21
    $region20: #{tpu_custom_call.1} parent=1 // pred_region
      _
    $region21: #{tpu_custom_call.1} parent=1 // pred_fallthru
      _
    // Predicated region
    $region22: #{tpu_custom_call.1} parent=1 // pred_check
      _
    $region23: #{tpu_custom_call.1} parent=1 // pred_check_branch
      %26 = sbr.rel (0) target = $region25
    $region24: #{tpu_custom_call.1} parent=1 // pred_region
      %s28 = ssub.s32 1024, 1024
      %29 = vsyncadd [#allocation4], %s28
      %s30 = sshll.u32 [#allocation3], 4
      %s31 = int_to_ptr.vmem [resolvable:$true] %s30
      %36 = dma.hbm_to_vmem [thread:$0]  %s5, 1024, %s31, [#allocation4], 64, 64, 4
    $region25: #{tpu_custom_call.1} parent=1 // pred_fallthru
      _
    // Predicated region
    $region26: #{tpu_custom_call.1} parent=1 // pred_check
      _
    $region27: #{tpu_custom_call.1} parent=1 // pred_check_branch
      %38 = sbr.rel (0) target = $region29
    $region28: #{tpu_custom_call.1} parent=1 // pred_region
      _
    $region29: #{tpu_custom_call.1} parent=1 // pred_fallthru
      _
    // Predicated region
    $region30: #{tpu_custom_call.1} parent=1 // pred_check
      _
    $region31: #{tpu_custom_call.1} parent=1 // pred_check_branch
      %40 = sbr.rel (0) target = $region33
    $region32: #{tpu_custom_call.1} parent=1 // pred_region
      %41 = dma.done [#allocation4], 1024
    $region33: #{tpu_custom_call.1} parent=1 // pred_fallthru
      _
    %s43 = sld [smem:[#allocation2]]
    %v44 = vld [vmem:[%s4] sm:$0xff]
    %v45 = vld [vmem:[%s4 + $0x8] sm:$0xff]
    %v46 = vld [vmem:[%s4 + $0x10] sm:$0xff]
    %v47 = vld [vmem:[%s4 + $0x18] sm:$0xff]
    %v48 = vld [vmem:[%s4 + $0x20] sm:$0xff]
    %v49 = vld [vmem:[%s4 + $0x28] sm:$0xff]
    %v50 = vld [vmem:[%s4 + $0x30] sm:$0xff]
    %v51 = vld [vmem:[%s4 + $0x38] sm:$0xff]
    %v52 = vld [vmem:[%s4 + $0x40] sm:$0xff]
    %v53 = vld [vmem:[%s4 + $0x48] sm:$0xff]
    %v54 = vld [vmem:[%s4 + $0x50] sm:$0xff]
    %v55 = vld [vmem:[%s4 + $0x58] sm:$0xff]
    %v56 = vld [vmem:[%s4 + $0x60] sm:$0xff]
    %v57 = vld [vmem:[%s4 + $0x68] sm:$0xff]
    %v58 = vld [vmem:[%s4 + $0x70] sm:$0xff]
    %v59 = vld [vmem:[%s4 + $0x78] sm:$0xff]
    %v60 = vld [vmem:[%s4 + $0x80] sm:$0xff]
    %v61 = vld [vmem:[%s4 + $0x88] sm:$0xff]
    %v62 = vld [vmem:[%s4 + $0x90] sm:$0xff]
    %v63 = vld [vmem:[%s4 + $0x98] sm:$0xff]
    %v64 = vld [vmem:[%s4 + $0xa0] sm:$0xff]
    %v65 = vld [vmem:[%s4 + $0xa8] sm:$0xff]
    %v66 = vld [vmem:[%s4 + $0xb0] sm:$0xff]
    %v67 = vld [vmem:[%s4 + $0xb8] sm:$0xff]
    %v68 = vld [vmem:[%s4 + $0xc0] sm:$0xff]
    %v69 = vld [vmem:[%s4 + $0xc8] sm:$0xff]
    %v70 = vld [vmem:[%s4 + $0xd0] sm:$0xff]
    %v71 = vld [vmem:[%s4 + $0xd8] sm:$0xff]
    %v72 = vld [vmem:[%s4 + $0xe0] sm:$0xff]
    %v73 = vld [vmem:[%s4 + $0xe8] sm:$0xff]
    %v74 = vld [vmem:[%s4 + $0xf0] sm:$0xff]
    %v75 = vld [vmem:[%s4 + $0xf8] sm:$0xff]
    %s76 = ssub.f32 1.0, %s43
    %v77 = vstv %s76
    %v78 = vmul.f32 %v77, %v44
    %v79 = vmul.f32 %v77, %v45
    %v80 = vmul.f32 %v77, %v46
    %v81 = vmul.f32 %v77, %v47
    %v82 = vmul.f32 %v77, %v48
    %v83 = vmul.f32 %v77, %v49
    %v84 = vmul.f32 %v77, %v50
    %v85 = vmul.f32 %v77, %v51
    %v86 = vmul.f32 %v77, %v52
    %v87 = vmul.f32 %v77, %v53
    %v88 = vmul.f32 %v77, %v54
    %v89 = vmul.f32 %v77, %v55
    %v90 = vmul.f32 %v77, %v56
    %v91 = vmul.f32 %v77, %v57
    %v92 = vmul.f32 %v77, %v58
    %v93 = vmul.f32 %v77, %v59
    %v94 = vmul.f32 %v77, %v60
    %v95 = vmul.f32 %v77, %v61
    %v96 = vmul.f32 %v77, %v62
    %v97 = vmul.f32 %v77, %v63
    %v98 = vmul.f32 %v77, %v64
    %v99 = vmul.f32 %v77, %v65
    %v100 = vmul.f32 %v77, %v66
    %v101 = vmul.f32 %v77, %v67
    %v102 = vmul.f32 %v77, %v68
    %v103 = vmul.f32 %v77, %v69
    %v104 = vmul.f32 %v77, %v70
    %v105 = vmul.f32 %v77, %v71
    %v106 = vmul.f32 %v77, %v72
    %v107 = vmul.f32 %v77, %v73
    %v108 = vmul.f32 %v77, %v74
    %v109 = vmul.f32 %v77, %v75
    %142 = vrot.lane.b32.xlu0 %v78, 127
    %v143 = vpop.permute.xlu0 %142
    %144 = vrot.lane.b32.xlu0 %v79, 127
    %v145 = vpop.permute.xlu0 %144
    %146 = vrot.lane.b32.xlu0 %v80, 127
    %v147 = vpop.permute.xlu0 %146
    %148 = vrot.lane.b32.xlu0 %v81, 127
    %v149 = vpop.permute.xlu0 %148
    %150 = vrot.lane.b32.xlu0 %v82, 127
    %v151 = vpop.permute.xlu0 %150
    %152 = vrot.lane.b32.xlu0 %v83, 127
    %v153 = vpop.permute.xlu0 %152
    %154 = vrot.lane.b32.xlu0 %v84, 127
    %v155 = vpop.permute.xlu0 %154
    %156 = vrot.lane.b32.xlu0 %v85, 127
    %v157 = vpop.permute.xlu0 %156
    %158 = vrot.lane.b32.xlu0 %v86, 127
    %v159 = vpop.permute.xlu0 %158
    %160 = vrot.lane.b32.xlu0 %v87, 127
    %v161 = vpop.permute.xlu0 %160
    %162 = vrot.lane.b32.xlu0 %v88, 127
    %v163 = vpop.permute.xlu0 %162
    %164 = vrot.lane.b32.xlu0 %v89, 127
    %v165 = vpop.permute.xlu0 %164
    %166 = vrot.lane.b32.xlu0 %v90, 127
    %v167 = vpop.permute.xlu0 %166
    %168 = vrot.lane.b32.xlu0 %v91, 127
    %v169 = vpop.permute.xlu0 %168
    %170 = vrot.lane.b32.xlu0 %v92, 127
    %v171 = vpop.permute.xlu0 %170
    %172 = vrot.lane.b32.xlu0 %v93, 127
    %v173 = vpop.permute.xlu0 %172
    %174 = vrot.lane.b32.xlu0 %v94, 127
    %v175 = vpop.permute.xlu0 %174
    %176 = vrot.lane.b32.xlu0 %v95, 127
    %v177 = vpop.permute.xlu0 %176
    %178 = vrot.lane.b32.xlu0 %v96, 127
    %v179 = vpop.permute.xlu0 %178
    %180 = vrot.lane.b32.xlu0 %v97, 127
    %v181 = vpop.permute.xlu0 %180
    %182 = vrot.lane.b32.xlu0 %v98, 127
    %v183 = vpop.permute.xlu0 %182
    %184 = vrot.lane.b32.xlu0 %v99, 127
    %v185 = vpop.permute.xlu0 %184
    %186 = vrot.lane.b32.xlu0 %v100, 127
    %v187 = vpop.permute.xlu0 %186
    %188 = vrot.lane.b32.xlu0 %v101, 127
    %v189 = vpop.permute.xlu0 %188
    %190 = vrot.lane.b32.xlu0 %v102, 127
    %v191 = vpop.permute.xlu0 %190
    %192 = vrot.lane.b32.xlu0 %v103, 127
    %v193 = vpop.permute.xlu0 %192
    %194 = vrot.lane.b32.xlu0 %v104, 127
    %v195 = vpop.permute.xlu0 %194
    %196 = vrot.lane.b32.xlu0 %v105, 127
    %v197 = vpop.permute.xlu0 %196
    %198 = vrot.lane.b32.xlu0 %v106, 127
    %v199 = vpop.permute.xlu0 %198
    %200 = vrot.lane.b32.xlu0 %v107, 127
    %v201 = vpop.permute.xlu0 %200
    %202 = vrot.lane.b32.xlu0 %v108, 127
    %v203 = vpop.permute.xlu0 %202
    %204 = vrot.lane.b32.xlu0 %v109, 127
    %v205 = vpop.permute.xlu0 %204
    %v238 = vsub.f32 %v44, %v143
    %v239 = vsub.f32 %v45, %v145
    %v240 = vsub.f32 %v46, %v147
    %v241 = vsub.f32 %v47, %v149
    %v242 = vsub.f32 %v48, %v151
    %v243 = vsub.f32 %v49, %v153
    %v244 = vsub.f32 %v50, %v155
    %v245 = vsub.f32 %v51, %v157
    %v246 = vsub.f32 %v52, %v159
    %v247 = vsub.f32 %v53, %v161
    %v248 = vsub.f32 %v54, %v163
    %v249 = vsub.f32 %v55, %v165
    %v250 = vsub.f32 %v56, %v167
    %v251 = vsub.f32 %v57, %v169
    %v252 = vsub.f32 %v58, %v171
    %v253 = vsub.f32 %v59, %v173
    %v254 = vsub.f32 %v60, %v175
    %v255 = vsub.f32 %v61, %v177
    %v256 = vsub.f32 %v62, %v179
    %v257 = vsub.f32 %v63, %v181
    %v258 = vsub.f32 %v64, %v183
    %v259 = vsub.f32 %v65, %v185
    %v260 = vsub.f32 %v66, %v187
    %v261 = vsub.f32 %v67, %v189
    %v262 = vsub.f32 %v68, %v191
    %v263 = vsub.f32 %v69, %v193
    %v264 = vsub.f32 %v70, %v195
    %v265 = vsub.f32 %v71, %v197
    %v266 = vsub.f32 %v72, %v199
    %v267 = vsub.f32 %v73, %v201
    %v268 = vsub.f32 %v74, %v203
    %v269 = vsub.f32 %v75, %v205
    %302 = vrot.lane.b32.xlu0 %v44, 1
    %v303 = vpop.permute.xlu0 %302
    %304 = vrot.lane.b32.xlu0 %v45, 1
    %v305 = vpop.permute.xlu0 %304
    %306 = vrot.lane.b32.xlu0 %v46, 1
    %v307 = vpop.permute.xlu0 %306
    %308 = vrot.lane.b32.xlu0 %v47, 1
    %v309 = vpop.permute.xlu0 %308
    %310 = vrot.lane.b32.xlu0 %v48, 1
    %v311 = vpop.permute.xlu0 %310
    %312 = vrot.lane.b32.xlu0 %v49, 1
    %v313 = vpop.permute.xlu0 %312
    %314 = vrot.lane.b32.xlu0 %v50, 1
    %v315 = vpop.permute.xlu0 %314
    %316 = vrot.lane.b32.xlu0 %v51, 1
    %v317 = vpop.permute.xlu0 %316
    %318 = vrot.lane.b32.xlu0 %v52, 1
    %v319 = vpop.permute.xlu0 %318
    %320 = vrot.lane.b32.xlu0 %v53, 1
    %v321 = vpop.permute.xlu0 %320
    %322 = vrot.lane.b32.xlu0 %v54, 1
    %v323 = vpop.permute.xlu0 %322
    %324 = vrot.lane.b32.xlu0 %v55, 1
    %v325 = vpop.permute.xlu0 %324
    %326 = vrot.lane.b32.xlu0 %v56, 1
    %v327 = vpop.permute.xlu0 %326
    %328 = vrot.lane.b32.xlu0 %v57, 1
    %v329 = vpop.permute.xlu0 %328
    %330 = vrot.lane.b32.xlu0 %v58, 1
    %v331 = vpop.permute.xlu0 %330
    %332 = vrot.lane.b32.xlu0 %v59, 1
    %v333 = vpop.permute.xlu0 %332
    %334 = vrot.lane.b32.xlu0 %v60, 1
    %v335 = vpop.permute.xlu0 %334
    %336 = vrot.lane.b32.xlu0 %v61, 1
    %v337 = vpop.permute.xlu0 %336
    %338 = vrot.lane.b32.xlu0 %v62, 1
    %v339 = vpop.permute.xlu0 %338
    %340 = vrot.lane.b32.xlu0 %v63, 1
    %v341 = vpop.permute.xlu0 %340
    %342 = vrot.lane.b32.xlu0 %v64, 1
    %v343 = vpop.permute.xlu0 %342
    %344 = vrot.lane.b32.xlu0 %v65, 1
    %v345 = vpop.permute.xlu0 %344
    %346 = vrot.lane.b32.xlu0 %v66, 1
    %v347 = vpop.permute.xlu0 %346
    %348 = vrot.lane.b32.xlu0 %v67, 1
    %v349 = vpop.permute.xlu0 %348
    %350 = vrot.lane.b32.xlu0 %v68, 1
    %v351 = vpop.permute.xlu0 %350
    %352 = vrot.lane.b32.xlu0 %v69, 1
    %v353 = vpop.permute.xlu0 %352
    %354 = vrot.lane.b32.xlu0 %v70, 1
    %v355 = vpop.permute.xlu0 %354
    %356 = vrot.lane.b32.xlu0 %v71, 1
    %v357 = vpop.permute.xlu0 %356
    %358 = vrot.lane.b32.xlu0 %v72, 1
    %v359 = vpop.permute.xlu0 %358
    %360 = vrot.lane.b32.xlu0 %v73, 1
    %v361 = vpop.permute.xlu0 %360
    %362 = vrot.lane.b32.xlu0 %v74, 1
    %v363 = vpop.permute.xlu0 %362
    %364 = vrot.lane.b32.xlu0 %v75, 1
    %v365 = vpop.permute.xlu0 %364
    %v398 = vmul.f32 %v44, %v303
    %v399 = vmul.f32 %v45, %v305
    %v400 = vmul.f32 %v46, %v307
    %v401 = vmul.f32 %v47, %v309
    %v402 = vmul.f32 %v48, %v311
    %v403 = vmul.f32 %v49, %v313
    %v404 = vmul.f32 %v50, %v315
    %v405 = vmul.f32 %v51, %v317
    %v406 = vmul.f32 %v52, %v319
    %v407 = vmul.f32 %v53, %v321
    %v408 = vmul.f32 %v54, %v323
    %v409 = vmul.f32 %v55, %v325
    %v410 = vmul.f32 %v56, %v327
    %v411 = vmul.f32 %v57, %v329
    %v412 = vmul.f32 %v58, %v331
    %v413 = vmul.f32 %v59, %v333
    %v414 = vmul.f32 %v60, %v335
    %v415 = vmul.f32 %v61, %v337
    %v416 = vmul.f32 %v62, %v339
    %v417 = vmul.f32 %v63, %v341
    %v418 = vmul.f32 %v64, %v343
    %v419 = vmul.f32 %v65, %v345
    %v420 = vmul.f32 %v66, %v347
    %v421 = vmul.f32 %v67, %v349
    %v422 = vmul.f32 %v68, %v351
    %v423 = vmul.f32 %v69, %v353
    %v424 = vmul.f32 %v70, %v355
    %v425 = vmul.f32 %v71, %v357
    %v426 = vmul.f32 %v72, %v359
    %v427 = vmul.f32 %v73, %v361
    %v428 = vmul.f32 %v74, %v363
    %v429 = vmul.f32 %v75, %v365
    %v430 = vstv %s43
    %v431 = vmul.f32 %v430, %v398
    %v432 = vmul.f32 %v430, %v399
    %v433 = vmul.f32 %v430, %v400
    %v434 = vmul.f32 %v430, %v401
    %v435 = vmul.f32 %v430, %v402
    %v436 = vmul.f32 %v430, %v403
    %v437 = vmul.f32 %v430, %v404
    %v438 = vmul.f32 %v430, %v405
    %v439 = vmul.f32 %v430, %v406
    %v440 = vmul.f32 %v430, %v407
    %v441 = vmul.f32 %v430, %v408
    %v442 = vmul.f32 %v430, %v409
    %v443 = vmul.f32 %v430, %v410
    %v444 = vmul.f32 %v430, %v411
    %v445 = vmul.f32 %v430, %v412
    %v446 = vmul.f32 %v430, %v413
    %v447 = vmul.f32 %v430, %v414
    %v448 = vmul.f32 %v430, %v415
    %v449 = vmul.f32 %v430, %v416
    %v450 = vmul.f32 %v430, %v417
    %v451 = vmul.f32 %v430, %v418
    %v452 = vmul.f32 %v430, %v419
    %v453 = vmul.f32 %v430, %v420
    %v454 = vmul.f32 %v430, %v421
    %v455 = vmul.f32 %v430, %v422
    %v456 = vmul.f32 %v430, %v423
    %v457 = vmul.f32 %v430, %v424
    %v458 = vmul.f32 %v430, %v425
    %v459 = vmul.f32 %v430, %v426
    %v460 = vmul.f32 %v430, %v427
    %v461 = vmul.f32 %v430, %v428
    %v462 = vmul.f32 %v430, %v429
    %v463 = vld [vmem:[%s1] sm:$0xff]
    %v464 = vld [vmem:[%s1 + $0x8] sm:$0xff]
    %v465 = vld [vmem:[%s1 + $0x10] sm:$0xff]
    %v466 = vld [vmem:[%s1 + $0x18] sm:$0xff]
    %v467 = vld [vmem:[%s1 + $0x20] sm:$0xff]
    %v468 = vld [vmem:[%s1 + $0x28] sm:$0xff]
    %v469 = vld [vmem:[%s1 + $0x30] sm:$0xff]
    %v470 = vld [vmem:[%s1 + $0x38] sm:$0xff]
    %v471 = vld [vmem:[%s1 + $0x40] sm:$0xff]
    %v472 = vld [vmem:[%s1 + $0x48] sm:$0xff]
    %v473 = vld [vmem:[%s1 + $0x50] sm:$0xff]
    %v474 = vld [vmem:[%s1 + $0x58] sm:$0xff]
    %v475 = vld [vmem:[%s1 + $0x60] sm:$0xff]
    %v476 = vld [vmem:[%s1 + $0x68] sm:$0xff]
    %v477 = vld [vmem:[%s1 + $0x70] sm:$0xff]
    %v478 = vld [vmem:[%s1 + $0x78] sm:$0xff]
    %v479 = vld [vmem:[%s1 + $0x80] sm:$0xff]
    %v480 = vld [vmem:[%s1 + $0x88] sm:$0xff]
    %v481 = vld [vmem:[%s1 + $0x90] sm:$0xff]
    %v482 = vld [vmem:[%s1 + $0x98] sm:$0xff]
    %v483 = vld [vmem:[%s1 + $0xa0] sm:$0xff]
    %v484 = vld [vmem:[%s1 + $0xa8] sm:$0xff]
    %v485 = vld [vmem:[%s1 + $0xb0] sm:$0xff]
    %v486 = vld [vmem:[%s1 + $0xb8] sm:$0xff]
    %v487 = vld [vmem:[%s1 + $0xc0] sm:$0xff]
    %v488 = vld [vmem:[%s1 + $0xc8] sm:$0xff]
    %v489 = vld [vmem:[%s1 + $0xd0] sm:$0xff]
    %v490 = vld [vmem:[%s1 + $0xd8] sm:$0xff]
    %v491 = vld [vmem:[%s1 + $0xe0] sm:$0xff]
    %v492 = vld [vmem:[%s1 + $0xe8] sm:$0xff]
    %v493 = vld [vmem:[%s1 + $0xf0] sm:$0xff]
    %v494 = vld [vmem:[%s1 + $0xf8] sm:$0xff]
    %v495 = vld [vmem:[%s2] sm:$0x1]
    %v496 = vld [vmem:[%s2 + $0x1] sm:$0x1]
    %v497 = vld [vmem:[%s2 + $0x2] sm:$0x1]
    %v498 = vld [vmem:[%s2 + $0x3] sm:$0x1]
    %v499 = vld [vmem:[%s2 + $0x4] sm:$0x1]
    %v500 = vld [vmem:[%s2 + $0x5] sm:$0x1]
    %v501 = vld [vmem:[%s2 + $0x6] sm:$0x1]
    %v502 = vld [vmem:[%s2 + $0x7] sm:$0x1]
    %v503 = vld [vmem:[%s2 + $0x8] sm:$0x1]
    %v504 = vld [vmem:[%s2 + $0x9] sm:$0x1]
    %v505 = vld [vmem:[%s2 + $0xa] sm:$0x1]
    %v506 = vld [vmem:[%s2 + $0xb] sm:$0x1]
    %v507 = vld [vmem:[%s2 + $0xc] sm:$0x1]
    %v508 = vld [vmem:[%s2 + $0xd] sm:$0x1]
    %v509 = vld [vmem:[%s2 + $0xe] sm:$0x1]
    %v510 = vld [vmem:[%s2 + $0xf] sm:$0x1]
    %v527 = vlaneseq
    %v528 = vshrl.u32 %v527, 7
    %v529 = vsub.s32 0, %v528
    %v530 = vrot.slane %v495, %v529
    %v531 = vlaneseq
    %v532 = vshrl.u32 %v531, 7
    %v533 = vsub.s32 0, %v532
    %v534 = vrot.slane %v496, %v533
    %v535 = vlaneseq
    %v536 = vshrl.u32 %v535, 7
    %v537 = vsub.s32 0, %v536
    %v538 = vrot.slane %v497, %v537
    %v539 = vlaneseq
    %v540 = vshrl.u32 %v539, 7
    %v541 = vsub.s32 0, %v540
    %v542 = vrot.slane %v498, %v541
    %v543 = vlaneseq
    %v544 = vshrl.u32 %v543, 7
    %v545 = vsub.s32 0, %v544
    %v546 = vrot.slane %v499, %v545
    %v547 = vlaneseq
    %v548 = vshrl.u32 %v547, 7
    %v549 = vsub.s32 0, %v548
    %v550 = vrot.slane %v500, %v549
    %v551 = vlaneseq
    %v552 = vshrl.u32 %v551, 7
    %v553 = vsub.s32 0, %v552
    %v554 = vrot.slane %v501, %v553
    %v555 = vlaneseq
    %v556 = vshrl.u32 %v555, 7
    %v557 = vsub.s32 0, %v556
    %v558 = vrot.slane %v502, %v557
    %v559 = vlaneseq
    %v560 = vshrl.u32 %v559, 7
    %v561 = vsub.s32 0, %v560
    %v562 = vrot.slane %v503, %v561
    %v563 = vlaneseq
    %v564 = vshrl.u32 %v563, 7
    %v565 = vsub.s32 0, %v564
    %v566 = vrot.slane %v504, %v565
    %v567 = vlaneseq
    %v568 = vshrl.u32 %v567, 7
    %v569 = vsub.s32 0, %v568
    %v570 = vrot.slane %v505, %v569
    %v571 = vlaneseq
    %v572 = vshrl.u32 %v571, 7
    %v573 = vsub.s32 0, %v572
    %v574 = vrot.slane %v506, %v573
    %v575 = vlaneseq
    %v576 = vshrl.u32 %v575, 7
    %v577 = vsub.s32 0, %v576
    %v578 = vrot.slane %v507, %v577
    %v579 = vlaneseq
    %v580 = vshrl.u32 %v579, 7
    %v581 = vsub.s32 0, %v580
    %v582 = vrot.slane %v508, %v581
    %v583 = vlaneseq
    %v584 = vshrl.u32 %v583, 7
    %v585 = vsub.s32 0, %v584
    %v586 = vrot.slane %v509, %v585
    %v587 = vlaneseq
    %v588 = vshrl.u32 %v587, 7
    %v589 = vsub.s32 0, %v588
    %v590 = vrot.slane %v510, %v589
    %v607 = vadd.f32 %v463, %v530
    %v608 = vadd.f32 %v464, %v530
    %v609 = vadd.f32 %v465, %v534
    %v610 = vadd.f32 %v466, %v534
    %v611 = vadd.f32 %v467, %v538
    %v612 = vadd.f32 %v468, %v538
    %v613 = vadd.f32 %v469, %v542
    %v614 = vadd.f32 %v470, %v542
    %v615 = vadd.f32 %v471, %v546
    %v616 = vadd.f32 %v472, %v546
    %v617 = vadd.f32 %v473, %v550
    %v618 = vadd.f32 %v474, %v550
    %v619 = vadd.f32 %v475, %v554
    %v620 = vadd.f32 %v476, %v554
    %v621 = vadd.f32 %v477, %v558
    %v622 = vadd.f32 %v478, %v558
    %v623 = vadd.f32 %v479, %v562
    %v624 = vadd.f32 %v480, %v562
    %v625 = vadd.f32 %v481, %v566
    %v626 = vadd.f32 %v482, %v566
    %v627 = vadd.f32 %v483, %v570
    %v628 = vadd.f32 %v484, %v570
    %v629 = vadd.f32 %v485, %v574
    %v630 = vadd.f32 %v486, %v574
    %v631 = vadd.f32 %v487, %v578
    %v632 = vadd.f32 %v488, %v578
    %v633 = vadd.f32 %v489, %v582
    %v634 = vadd.f32 %v490, %v582
    %v635 = vadd.f32 %v491, %v586
    %v636 = vadd.f32 %v492, %v586
    %v637 = vadd.f32 %v493, %v590
    %v638 = vadd.f32 %v494, %v590
    %640 = vset.pattern.permute.xlu0 0
    %641 = vperm.xlu0 %640, %v238
    %v642 = vpop.permute.xlu0 %641
    %645 = vset.pattern.permute.xlu0 0
    %646 = vperm.xlu0 %645, %v239
    %v647 = vpop.permute.xlu0 %646
    %650 = vset.pattern.permute.xlu0 0
    %651 = vperm.xlu0 %650, %v240
    %v652 = vpop.permute.xlu0 %651
    %655 = vset.pattern.permute.xlu0 0
    %656 = vperm.xlu0 %655, %v241
    %v657 = vpop.permute.xlu0 %656
    %660 = vset.pattern.permute.xlu0 0
    %661 = vperm.xlu0 %660, %v242
    %v662 = vpop.permute.xlu0 %661
    %665 = vset.pattern.permute.xlu0 0
    %666 = vperm.xlu0 %665, %v243
    %v667 = vpop.permute.xlu0 %666
    %670 = vset.pattern.permute.xlu0 0
    %671 = vperm.xlu0 %670, %v244
    %v672 = vpop.permute.xlu0 %671
    %675 = vset.pattern.permute.xlu0 0
    %676 = vperm.xlu0 %675, %v245
    %v677 = vpop.permute.xlu0 %676
    %680 = vset.pattern.permute.xlu0 0
    %681 = vperm.xlu0 %680, %v246
    %v682 = vpop.permute.xlu0 %681
    %685 = vset.pattern.permute.xlu0 0
    %686 = vperm.xlu0 %685, %v247
    %v687 = vpop.permute.xlu0 %686
    %690 = vset.pattern.permute.xlu0 0
    %691 = vperm.xlu0 %690, %v248
    %v692 = vpop.permute.xlu0 %691
    %695 = vset.pattern.permute.xlu0 0
    %696 = vperm.xlu0 %695, %v249
    %v697 = vpop.permute.xlu0 %696
    %700 = vset.pattern.permute.xlu0 0
    %701 = vperm.xlu0 %700, %v250
    %v702 = vpop.permute.xlu0 %701
    %705 = vset.pattern.permute.xlu0 0
    %706 = vperm.xlu0 %705, %v251
    %v707 = vpop.permute.xlu0 %706
    %710 = vset.pattern.permute.xlu0 0
    %711 = vperm.xlu0 %710, %v252
    %v712 = vpop.permute.xlu0 %711
    %715 = vset.pattern.permute.xlu0 0
    %716 = vperm.xlu0 %715, %v253
    %v717 = vpop.permute.xlu0 %716
    %720 = vset.pattern.permute.xlu0 0
    %721 = vperm.xlu0 %720, %v254
    %v722 = vpop.permute.xlu0 %721
    %725 = vset.pattern.permute.xlu0 0
    %726 = vperm.xlu0 %725, %v255
    %v727 = vpop.permute.xlu0 %726
    %730 = vset.pattern.permute.xlu0 0
    %731 = vperm.xlu0 %730, %v256
    %v732 = vpop.permute.xlu0 %731
    %735 = vset.pattern.permute.xlu0 0
    %736 = vperm.xlu0 %735, %v257
    %v737 = vpop.permute.xlu0 %736
    %740 = vset.pattern.permute.xlu0 0
    %741 = vperm.xlu0 %740, %v258
    %v742 = vpop.permute.xlu0 %741
    %745 = vset.pattern.permute.xlu0 0
    %746 = vperm.xlu0 %745, %v259
    %v747 = vpop.permute.xlu0 %746
    %750 = vset.pattern.permute.xlu0 0
    %751 = vperm.xlu0 %750, %v260
    %v752 = vpop.permute.xlu0 %751
    %755 = vset.pattern.permute.xlu0 0
    %756 = vperm.xlu0 %755, %v261
    %v757 = vpop.permute.xlu0 %756
    %760 = vset.pattern.permute.xlu0 0
    %761 = vperm.xlu0 %760, %v262
    %v762 = vpop.permute.xlu0 %761
    %765 = vset.pattern.permute.xlu0 0
    %766 = vperm.xlu0 %765, %v263
    %v767 = vpop.permute.xlu0 %766
    %770 = vset.pattern.permute.xlu0 0
    %771 = vperm.xlu0 %770, %v264
    %v772 = vpop.permute.xlu0 %771
    %775 = vset.pattern.permute.xlu0 0
    %776 = vperm.xlu0 %775, %v265
    %v777 = vpop.permute.xlu0 %776
    %780 = vset.pattern.permute.xlu0 0
    %781 = vperm.xlu0 %780, %v266
    %v782 = vpop.permute.xlu0 %781
    %785 = vset.pattern.permute.xlu0 0
    %786 = vperm.xlu0 %785, %v267
    %v787 = vpop.permute.xlu0 %786
    %790 = vset.pattern.permute.xlu0 0
    %791 = vperm.xlu0 %790, %v268
    %v792 = vpop.permute.xlu0 %791
    %795 = vset.pattern.permute.xlu0 0
    %796 = vperm.xlu0 %795, %v269
    %v797 = vpop.permute.xlu0 %796
    %v799 = vmul.f32 %v607, %v642
    %v800 = vmul.f32 %v608, %v647
    %v801 = vmul.f32 %v609, %v652
    %v802 = vmul.f32 %v610, %v657
    %v803 = vmul.f32 %v611, %v662
    %v804 = vmul.f32 %v612, %v667
    %v805 = vmul.f32 %v613, %v672
    %v806 = vmul.f32 %v614, %v677
    %v807 = vmul.f32 %v615, %v682
    %v808 = vmul.f32 %v616, %v687
    %v809 = vmul.f32 %v617, %v692
    %v810 = vmul.f32 %v618, %v697
    %v811 = vmul.f32 %v619, %v702
    %v812 = vmul.f32 %v620, %v707
    %v813 = vmul.f32 %v621, %v712
    %v814 = vmul.f32 %v622, %v717
    %v815 = vmul.f32 %v623, %v722
    %v816 = vmul.f32 %v624, %v727
    %v817 = vmul.f32 %v625, %v732
    %v818 = vmul.f32 %v626, %v737
    %v819 = vmul.f32 %v627, %v742
    %v820 = vmul.f32 %v628, %v747
    %v821 = vmul.f32 %v629, %v752
    %v822 = vmul.f32 %v630, %v757
    %v823 = vmul.f32 %v631, %v762
    %v824 = vmul.f32 %v632, %v767
    %v825 = vmul.f32 %v633, %v772
    %v826 = vmul.f32 %v634, %v777
    %v827 = vmul.f32 %v635, %v782
    %v828 = vmul.f32 %v636, %v787
    %v829 = vmul.f32 %v637, %v792
    %v830 = vmul.f32 %v638, %v797
    %v831 = vld [vmem:[%s3] sm:$0x1]
    %v832 = vld [vmem:[%s3 + $0x1] sm:$0x1]
    %v833 = vld [vmem:[%s3 + $0x2] sm:$0x1]
    %v834 = vld [vmem:[%s3 + $0x3] sm:$0x1]
    %v835 = vld [vmem:[%s3 + $0x4] sm:$0x1]
    %v836 = vld [vmem:[%s3 + $0x5] sm:$0x1]
    %v837 = vld [vmem:[%s3 + $0x6] sm:$0x1]
    %v838 = vld [vmem:[%s3 + $0x7] sm:$0x1]
    %v839 = vld [vmem:[%s3 + $0x8] sm:$0x1]
    %v840 = vld [vmem:[%s3 + $0x9] sm:$0x1]
    %v841 = vld [vmem:[%s3 + $0xa] sm:$0x1]
    %v842 = vld [vmem:[%s3 + $0xb] sm:$0x1]
    %v843 = vld [vmem:[%s3 + $0xc] sm:$0x1]
    %v844 = vld [vmem:[%s3 + $0xd] sm:$0x1]
    %v845 = vld [vmem:[%s3 + $0xe] sm:$0x1]
    %v846 = vld [vmem:[%s3 + $0xf] sm:$0x1]
    %v863 = vlaneseq
    %v864 = vshrl.u32 %v863, 7
    %v865 = vsub.s32 0, %v864
    %v866 = vrot.slane %v831, %v865
    %v867 = vlaneseq
    %v868 = vshrl.u32 %v867, 7
    %v869 = vsub.s32 0, %v868
    %v870 = vrot.slane %v832, %v869
    %v871 = vlaneseq
    %v872 = vshrl.u32 %v871, 7
    %v873 = vsub.s32 0, %v872
    %v874 = vrot.slane %v833, %v873
    %v875 = vlaneseq
    %v876 = vshrl.u32 %v875, 7
    %v877 = vsub.s32 0, %v876
    %v878 = vrot.slane %v834, %v877
    %v879 = vlaneseq
    %v880 = vshrl.u32 %v879, 7
    %v881 = vsub.s32 0, %v880
    %v882 = vrot.slane %v835, %v881
    %v883 = vlaneseq
    %v884 = vshrl.u32 %v883, 7
    %v885 = vsub.s32 0, %v884
    %v886 = vrot.slane %v836, %v885
    %v887 = vlaneseq
    %v888 = vshrl.u32 %v887, 7
    %v889 = vsub.s32 0, %v888
    %v890 = vrot.slane %v837, %v889
    %v891 = vlaneseq
    %v892 = vshrl.u32 %v891, 7
    %v893 = vsub.s32 0, %v892
    %v894 = vrot.slane %v838, %v893
    %v895 = vlaneseq
    %v896 = vshrl.u32 %v895, 7
    %v897 = vsub.s32 0, %v896
    %v898 = vrot.slane %v839, %v897
    %v899 = vlaneseq
    %v900 = vshrl.u32 %v899, 7
    %v901 = vsub.s32 0, %v900
    %v902 = vrot.slane %v840, %v901
    %v903 = vlaneseq
    %v904 = vshrl.u32 %v903, 7
    %v905 = vsub.s32 0, %v904
    %v906 = vrot.slane %v841, %v905
    %v907 = vlaneseq
    %v908 = vshrl.u32 %v907, 7
    %v909 = vsub.s32 0, %v908
    %v910 = vrot.slane %v842, %v909
    %v911 = vlaneseq
    %v912 = vshrl.u32 %v911, 7
    %v913 = vsub.s32 0, %v912
    %v914 = vrot.slane %v843, %v913
    %v915 = vlaneseq
    %v916 = vshrl.u32 %v915, 7
    %v917 = vsub.s32 0, %v916
    %v918 = vrot.slane %v844, %v917
    %v919 = vlaneseq
    %v920 = vshrl.u32 %v919, 7
    %v921 = vsub.s32 0, %v920
    %v922 = vrot.slane %v845, %v921
    %v923 = vlaneseq
    %v924 = vshrl.u32 %v923, 7
    %v925 = vsub.s32 0, %v924
    %v926 = vrot.slane %v846, %v925
    %944 = vset.pattern.permute.xlu0 1
    %945 = vperm.xlu0 %944, %v431
    %v946 = vpop.permute.xlu0 %945
    %949 = vset.pattern.permute.xlu0 1
    %950 = vperm.xlu0 %949, %v432
    %v951 = vpop.permute.xlu0 %950
    %954 = vset.pattern.permute.xlu0 1
    %955 = vperm.xlu0 %954, %v433
    %v956 = vpop.permute.xlu0 %955
    %959 = vset.pattern.permute.xlu0 1
    %960 = vperm.xlu0 %959, %v434
    %v961 = vpop.permute.xlu0 %960
    %964 = vset.pattern.permute.xlu0 1
    %965 = vperm.xlu0 %964, %v435
    %v966 = vpop.permute.xlu0 %965
    %969 = vset.pattern.permute.xlu0 1
    %970 = vperm.xlu0 %969, %v436
    %v971 = vpop.permute.xlu0 %970
    %974 = vset.pattern.permute.xlu0 1
    %975 = vperm.xlu0 %974, %v437
    %v976 = vpop.permute.xlu0 %975
    %979 = vset.pattern.permute.xlu0 1
    %980 = vperm.xlu0 %979, %v438
    %v981 = vpop.permute.xlu0 %980
    %984 = vset.pattern.permute.xlu0 1
    %985 = vperm.xlu0 %984, %v439
    %v986 = vpop.permute.xlu0 %985
    %989 = vset.pattern.permute.xlu0 1
    %990 = vperm.xlu0 %989, %v440
    %v991 = vpop.permute.xlu0 %990
    %994 = vset.pattern.permute.xlu0 1
    %995 = vperm.xlu0 %994, %v441
    %v996 = vpop.permute.xlu0 %995
    %999 = vset.pattern.permute.xlu0 1
    %1000 = vperm.xlu0 %999, %v442
    %v1001 = vpop.permute.xlu0 %1000
    %1004 = vset.pattern.permute.xlu0 1
    %1005 = vperm.xlu0 %1004, %v443
    %v1006 = vpop.permute.xlu0 %1005
    %1009 = vset.pattern.permute.xlu0 1
    %1010 = vperm.xlu0 %1009, %v444
    %v1011 = vpop.permute.xlu0 %1010
    %1014 = vset.pattern.permute.xlu0 1
    %1015 = vperm.xlu0 %1014, %v445
    %v1016 = vpop.permute.xlu0 %1015
    %1019 = vset.pattern.permute.xlu0 1
    %1020 = vperm.xlu0 %1019, %v446
    %v1021 = vpop.permute.xlu0 %1020
    %1024 = vset.pattern.permute.xlu0 1
    %1025 = vperm.xlu0 %1024, %v447
    %v1026 = vpop.permute.xlu0 %1025
    %1029 = vset.pattern.permute.xlu0 1
    %1030 = vperm.xlu0 %1029, %v448
    %v1031 = vpop.permute.xlu0 %1030
    %1034 = vset.pattern.permute.xlu0 1
    %1035 = vperm.xlu0 %1034, %v449
    %v1036 = vpop.permute.xlu0 %1035
    %1039 = vset.pattern.permute.xlu0 1
    %1040 = vperm.xlu0 %1039, %v450
    %v1041 = vpop.permute.xlu0 %1040
    %1044 = vset.pattern.permute.xlu0 1
    %1045 = vperm.xlu0 %1044, %v451
    %v1046 = vpop.permute.xlu0 %1045
    %1049 = vset.pattern.permute.xlu0 1
    %1050 = vperm.xlu0 %1049, %v452
    %v1051 = vpop.permute.xlu0 %1050
    %1054 = vset.pattern.permute.xlu0 1
    %1055 = vperm.xlu0 %1054, %v453
    %v1056 = vpop.permute.xlu0 %1055
    %1059 = vset.pattern.permute.xlu0 1
    %1060 = vperm.xlu0 %1059, %v454
    %v1061 = vpop.permute.xlu0 %1060
    %1064 = vset.pattern.permute.xlu0 1
    %1065 = vperm.xlu0 %1064, %v455
    %v1066 = vpop.permute.xlu0 %1065
    %1069 = vset.pattern.permute.xlu0 1
    %1070 = vperm.xlu0 %1069, %v456
    %v1071 = vpop.permute.xlu0 %1070
    %1074 = vset.pattern.permute.xlu0 1
    %1075 = vperm.xlu0 %1074, %v457
    %v1076 = vpop.permute.xlu0 %1075
    %1079 = vset.pattern.permute.xlu0 1
    %1080 = vperm.xlu0 %1079, %v458
    %v1081 = vpop.permute.xlu0 %1080
    %1084 = vset.pattern.permute.xlu0 1
    %1085 = vperm.xlu0 %1084, %v459
    %v1086 = vpop.permute.xlu0 %1085
    %1089 = vset.pattern.permute.xlu0 1
    %1090 = vperm.xlu0 %1089, %v460
    %v1091 = vpop.permute.xlu0 %1090
    %1094 = vset.pattern.permute.xlu0 1
    %1095 = vperm.xlu0 %1094, %v461
    %v1096 = vpop.permute.xlu0 %1095
    %1099 = vset.pattern.permute.xlu0 1
    %1100 = vperm.xlu0 %1099, %v462
    %v1101 = vpop.permute.xlu0 %1100
    %v1103 = vmul.f32 %v866, %v946
    %v1104 = vmul.f32 %v866, %v951
    %v1105 = vmul.f32 %v870, %v956
    %v1106 = vmul.f32 %v870, %v961
    %v1107 = vmul.f32 %v874, %v966
    %v1108 = vmul.f32 %v874, %v971
    %v1109 = vmul.f32 %v878, %v976
    %v1110 = vmul.f32 %v878, %v981
    %v1111 = vmul.f32 %v882, %v986
    %v1112 = vmul.f32 %v882, %v991
    %v1113 = vmul.f32 %v886, %v996
    %v1114 = vmul.f32 %v886, %v1001
    %v1115 = vmul.f32 %v890, %v1006
    %v1116 = vmul.f32 %v890, %v1011
    %v1117 = vmul.f32 %v894, %v1016
    %v1118 = vmul.f32 %v894, %v1021
    %v1119 = vmul.f32 %v898, %v1026
    %v1120 = vmul.f32 %v898, %v1031
    %v1121 = vmul.f32 %v902, %v1036
    %v1122 = vmul.f32 %v902, %v1041
    %v1123 = vmul.f32 %v906, %v1046
    %v1124 = vmul.f32 %v906, %v1051
    %v1125 = vmul.f32 %v910, %v1056
    %v1126 = vmul.f32 %v910, %v1061
    %v1127 = vmul.f32 %v914, %v1066
    %v1128 = vmul.f32 %v914, %v1071
    %v1129 = vmul.f32 %v918, %v1076
    %v1130 = vmul.f32 %v918, %v1081
    %v1131 = vmul.f32 %v922, %v1086
    %v1132 = vmul.f32 %v922, %v1091
    %v1133 = vmul.f32 %v926, %v1096
    %v1134 = vmul.f32 %v926, %v1101
    %v1135 = vadd.f32 %v799, %v1103
    %v1136 = vadd.f32 %v800, %v1104
    %v1137 = vadd.f32 %v801, %v1105
    %v1138 = vadd.f32 %v802, %v1106
    %v1139 = vadd.f32 %v803, %v1107
    %v1140 = vadd.f32 %v804, %v1108
    %v1141 = vadd.f32 %v805, %v1109
    %v1142 = vadd.f32 %v806, %v1110
    %v1143 = vadd.f32 %v807, %v1111
    %v1144 = vadd.f32 %v808, %v1112
    %v1145 = vadd.f32 %v809, %v1113
    %v1146 = vadd.f32 %v810, %v1114
    %v1147 = vadd.f32 %v811, %v1115
    %v1148 = vadd.f32 %v812, %v1116
    %v1149 = vadd.f32 %v813, %v1117
    %v1150 = vadd.f32 %v814, %v1118
    %v1151 = vadd.f32 %v815, %v1119
    %v1152 = vadd.f32 %v816, %v1120
    %v1153 = vadd.f32 %v817, %v1121
    %v1154 = vadd.f32 %v818, %v1122
    %v1155 = vadd.f32 %v819, %v1123
    %v1156 = vadd.f32 %v820, %v1124
    %v1157 = vadd.f32 %v821, %v1125
    %v1158 = vadd.f32 %v822, %v1126
    %v1159 = vadd.f32 %v823, %v1127
    %v1160 = vadd.f32 %v824, %v1128
    %v1161 = vadd.f32 %v825, %v1129
    %v1162 = vadd.f32 %v826, %v1130
    %v1163 = vadd.f32 %v827, %v1131
    %v1164 = vadd.f32 %v828, %v1132
    %v1165 = vadd.f32 %v829, %v1133
    %v1166 = vadd.f32 %v830, %v1134
    %v1167 = vpack.c.bf16 %v1136, %v1135
    %v1168 = vpack.c.bf16 %v1138, %v1137
    %v1169 = vpack.c.bf16 %v1140, %v1139
    %v1170 = vpack.c.bf16 %v1142, %v1141
    %v1171 = vpack.c.bf16 %v1144, %v1143
    %v1172 = vpack.c.bf16 %v1146, %v1145
    %v1173 = vpack.c.bf16 %v1148, %v1147
    %v1174 = vpack.c.bf16 %v1150, %v1149
    %v1175 = vpack.c.bf16 %v1152, %v1151
    %v1176 = vpack.c.bf16 %v1154, %v1153
    %v1177 = vpack.c.bf16 %v1156, %v1155
    %v1178 = vpack.c.bf16 %v1158, %v1157
    %v1179 = vpack.c.bf16 %v1160, %v1159
    %v1180 = vpack.c.bf16 %v1162, %v1161
    %v1181 = vpack.c.bf16 %v1164, %v1163
    %v1182 = vpack.c.bf16 %v1166, %v1165
    %v1183 = vld [vmem:[#allocation3] sm:$0xf]
    %v1184 = vld [vmem:[#allocation3 + $0x4] sm:$0xf]
    %v1185 = vld [vmem:[#allocation3 + $0x8] sm:$0xf]
    %v1186 = vld [vmem:[#allocation3 + $0xc] sm:$0xf]
    %v1187 = vld [vmem:[#allocation3 + $0x10] sm:$0xf]
    %v1188 = vld [vmem:[#allocation3 + $0x14] sm:$0xf]
    %v1189 = vld [vmem:[#allocation3 + $0x18] sm:$0xf]
    %v1190 = vld [vmem:[#allocation3 + $0x1c] sm:$0xf]
    %v1191 = vld [vmem:[#allocation3 + $0x20] sm:$0xf]
    %v1192 = vld [vmem:[#allocation3 + $0x24] sm:$0xf]
    %v1193 = vld [vmem:[#allocation3 + $0x28] sm:$0xf]
    %v1194 = vld [vmem:[#allocation3 + $0x2c] sm:$0xf]
    %v1195 = vld [vmem:[#allocation3 + $0x30] sm:$0xf]
    %v1196 = vld [vmem:[#allocation3 + $0x34] sm:$0xf]
    %v1197 = vld [vmem:[#allocation3 + $0x38] sm:$0xf]
    %v1198 = vld [vmem:[#allocation3 + $0x3c] sm:$0xf]
    %v1199 = vld [vmem:[%s6] sm:$0x1]
    %v1201 = vlaneseq
    %v1202 = vshrl.u32 %v1201, 7
    %v1203 = vsub.s32 0, %v1202
    %v1204 = vrot.slane %v1199, %v1203
    %v1222 = vunpack.c.l.b16 %v1183
    %v1223 = vunpack.c.l.b16 %v1184
    %v1224 = vunpack.c.l.b16 %v1185
    %v1225 = vunpack.c.l.b16 %v1186
    %v1226 = vunpack.c.l.b16 %v1187
    %v1227 = vunpack.c.l.b16 %v1188
    %v1228 = vunpack.c.l.b16 %v1189
    %v1229 = vunpack.c.l.b16 %v1190
    %v1230 = vunpack.c.l.b16 %v1191
    %v1231 = vunpack.c.l.b16 %v1192
    %v1232 = vunpack.c.l.b16 %v1193
    %v1233 = vunpack.c.l.b16 %v1194
    %v1234 = vunpack.c.l.b16 %v1195
    %v1235 = vunpack.c.l.b16 %v1196
    %v1236 = vunpack.c.l.b16 %v1197
    %v1237 = vunpack.c.l.b16 %v1198
    %v1238 = vpack.c.b16 %v1223, %v1222
    %v1239 = vpack.c.b16 %v1225, %v1224
    %v1240 = vpack.c.b16 %v1227, %v1226
    %v1241 = vpack.c.b16 %v1229, %v1228
    %v1242 = vpack.c.b16 %v1231, %v1230
    %v1243 = vpack.c.b16 %v1233, %v1232
    %v1244 = vpack.c.b16 %v1235, %v1234
    %v1245 = vpack.c.b16 %v1237, %v1236
    %1254 = vmatprep.subr.bf16.mxu0 0
    %1255 = vmatpush1.bf16.msra.mxu0 %v1238
    %1256 = vmatprep.subr.bf16.mxu0 0
    %1257 = vmatpush1.bf16.msra.mxu0 %v1239
    %1258 = vmatprep.subr.bf16.mxu0 0
    %1259 = vmatpush1.bf16.msra.mxu0 %v1240
    %1260 = vmatprep.subr.bf16.mxu0 0
    %1261 = vmatpush1.bf16.msra.mxu0 %v1241
    %1262 = vmatprep.subr.bf16.mxu0 0
    %1263 = vmatpush1.bf16.msra.mxu0 %v1242
    %1264 = vmatprep.subr.bf16.mxu0 0
    %1265 = vmatpush1.bf16.msra.mxu0 %v1243
    %1266 = vmatprep.subr.bf16.mxu0 0
    %1267 = vmatpush1.bf16.msra.mxu0 %v1244
    %1268 = vmatprep.subr.bf16.mxu0 0
    %1269 = vmatpush1.bf16.msra.mxu0 %v1245
    %1270 = vmatprep.subr.bf16.mxu0 0
    %1271 = vmatpush1.bf16.msra.mxu0 0
    %1272 = vmatprep.subr.bf16.mxu0 0
    %1273 = vmatpush1.bf16.msra.mxu0 0
    %1274 = vmatprep.subr.bf16.mxu0 0
    %1275 = vmatpush1.bf16.msra.mxu0 0
    %1276 = vmatprep.subr.bf16.mxu0 0
    %1277 = vmatpush1.bf16.msra.mxu0 0
    %1278 = vmatprep.subr.bf16.mxu0 0
    %1279 = vmatpush1.bf16.msra.mxu0 0
    %1280 = vmatprep.subr.bf16.mxu0 0
    %1281 = vmatpush1.bf16.msra.mxu0 0
    %1282 = vmatprep.subr.bf16.mxu0 0
    %1283 = vmatpush1.bf16.msra.mxu0 0
    %1284 = vmatprep.subr.bf16.mxu0 0
    %1285 = vmatpush1.bf16.msra.mxu0 0
    %1286 = vmatprep.mubr.bf16.mxu0 0
    %1287 = vmatmul.mubr.bf16.gmra.mrb[0].mxu0 %v1167
    %v1288 = vpop.f32.mrb[0].mxu0
    %v1289 = vadd.f32 %v1204, %v1288
    %v1290 = vpop.f32.mrb[0].mxu0
    %v1291 = vpop.f32.mrb[0].mxu0
    %v1292 = vadd.f32 %v1204, %v1291
    %v1293 = vpop.f32.mrb[0].mxu0
    %1294 = vmatprep.mubr.bf16.mxu0 0
    %1295 = vmatmul.mubr.bf16.gmra.mrb[0].mxu0 %v1168
    %v1296 = vpop.f32.mrb[0].mxu0
    %v1297 = vadd.f32 %v1204, %v1296
    %v1298 = vpop.f32.mrb[0].mxu0
    %v1299 = vpop.f32.mrb[0].mxu0
    %v1300 = vadd.f32 %v1204, %v1299
    %v1301 = vpop.f32.mrb[0].mxu0
    %1302 = vmatprep.mubr.bf16.mxu0 0
    %1303 = vmatmul.mubr.bf16.gmra.mrb[0].mxu0 %v1169
    %v1304 = vpop.f32.mrb[0].mxu0
    %v1305 = vadd.f32 %v1204, %v1304
    %v1306 = vpop.f32.mrb[0].mxu0
    %v1307 = vpop.f32.mrb[0].mxu0
    %v1308 = vadd.f32 %v1204, %v1307
    %v1309 = vpop.f32.mrb[0].mxu0
    %1310 = vmatprep.mubr.bf16.mxu0 0
    %1311 = vmatmul.mubr.bf16.gmra.mrb[0].mxu0 %v1170
    %v1312 = vpop.f32.mrb[0].mxu0
    %v1313 = vadd.f32 %v1204, %v1312
    %v1314 = vpop.f32.mrb[0].mxu0
    %v1315 = vpop.f32.mrb[0].mxu0
    %v1316 = vadd.f32 %v1204, %v1315
    %v1317 = vpop.f32.mrb[0].mxu0
    %1318 = vmatprep.mubr.bf16.mxu0 0
    %1319 = vmatmul.mubr.bf16.gmra.mrb[0].mxu0 %v1171
    %v1320 = vpop.f32.mrb[0].mxu0
    %v1321 = vadd.f32 %v1204, %v1320
    %v1322 = vpop.f32.mrb[0].mxu0
    %v1323 = vpop.f32.mrb[0].mxu0
    %v1324 = vadd.f32 %v1204, %v1323
    %v1325 = vpop.f32.mrb[0].mxu0
    %1326 = vmatprep.mubr.bf16.mxu0 0
    %1327 = vmatmul.mubr.bf16.gmra.mrb[0].mxu0 %v1172
    %v1328 = vpop.f32.mrb[0].mxu0
    %v1329 = vadd.f32 %v1204, %v1328
    %v1330 = vpop.f32.mrb[0].mxu0
    %v1331 = vpop.f32.mrb[0].mxu0
    %v1332 = vadd.f32 %v1204, %v1331
    %v1333 = vpop.f32.mrb[0].mxu0
    %1334 = vmatprep.mubr.bf16.mxu0 0
    %1335 = vmatmul.mubr.bf16.gmra.mrb[0].mxu0 %v1173
    %v1336 = vpop.f32.mrb[0].mxu0
    %v1337 = vadd.f32 %v1204, %v1336
    %v1338 = vpop.f32.mrb[0].mxu0
    %v1339 = vpop.f32.mrb[0].mxu0
    %v1340 = vadd.f32 %v1204, %v1339
    %v1341 = vpop.f32.mrb[0].mxu0
    %1342 = vmatprep.mubr.bf16.mxu0 0
    %1343 = vmatmul.mubr.bf16.gmra.mrb[0].mxu0 %v1174
    %v1344 = vpop.f32.mrb[0].mxu0
    %v1345 = vadd.f32 %v1204, %v1344
    %v1346 = vpop.f32.mrb[0].mxu0
    %v1347 = vpop.f32.mrb[0].mxu0
    %v1348 = vadd.f32 %v1204, %v1347
    %v1349 = vpop.f32.mrb[0].mxu0
    %1350 = vmatprep.mubr.bf16.mxu0 0
    %1351 = vmatmul.mubr.bf16.gmra.mrb[0].mxu0 %v1175
    %v1352 = vpop.f32.mrb[0].mxu0
    %v1353 = vadd.f32 %v1204, %v1352
    %v1354 = vpop.f32.mrb[0].mxu0
    %v1355 = vpop.f32.mrb[0].mxu0
    %v1356 = vadd.f32 %v1204, %v1355
    %v1357 = vpop.f32.mrb[0].mxu0
    %1358 = vmatprep.mubr.bf16.mxu0 0
    %1359 = vmatmul.mubr.bf16.gmra.mrb[0].mxu0 %v1176
    %v1360 = vpop.f32.mrb[0].mxu0
    %v1361 = vadd.f32 %v1204, %v1360
    %v1362 = vpop.f32.mrb[0].mxu0
    %v1363 = vpop.f32.mrb[0].mxu0
    %v1364 = vadd.f32 %v1204, %v1363
    %v1365 = vpop.f32.mrb[0].mxu0
    %1366 = vmatprep.mubr.bf16.mxu0 0
    %1367 = vmatmul.mubr.bf16.gmra.mrb[0].mxu0 %v1177
    %v1368 = vpop.f32.mrb[0].mxu0
    %v1369 = vadd.f32 %v1204, %v1368
    %v1370 = vpop.f32.mrb[0].mxu0
    %v1371 = vpop.f32.mrb[0].mxu0
    %v1372 = vadd.f32 %v1204, %v1371
    %v1373 = vpop.f32.mrb[0].mxu0
    %1374 = vmatprep.mubr.bf16.mxu0 0
    %1375 = vmatmul.mubr.bf16.gmra.mrb[0].mxu0 %v1178
    %v1376 = vpop.f32.mrb[0].mxu0
    %v1377 = vadd.f32 %v1204, %v1376
    %v1378 = vpop.f32.mrb[0].mxu0
    %v1379 = vpop.f32.mrb[0].mxu0
    %v1380 = vadd.f32 %v1204, %v1379
    %v1381 = vpop.f32.mrb[0].mxu0
    %1382 = vmatprep.mubr.bf16.mxu0 0
    %1383 = vmatmul.mubr.bf16.gmra.mrb[0].mxu0 %v1179
    %v1384 = vpop.f32.mrb[0].mxu0
    %v1385 = vadd.f32 %v1204, %v1384
    %v1386 = vpop.f32.mrb[0].mxu0
    %v1387 = vpop.f32.mrb[0].mxu0
    %v1388 = vadd.f32 %v1204, %v1387
    %v1389 = vpop.f32.mrb[0].mxu0
    %1390 = vmatprep.mubr.bf16.mxu0 0
    %1391 = vmatmul.mubr.bf16.gmra.mrb[0].mxu0 %v1180
    %v1392 = vpop.f32.mrb[0].mxu0
    %v1393 = vadd.f32 %v1204, %v1392
    %v1394 = vpop.f32.mrb[0].mxu0
    %v1395 = vpop.f32.mrb[0].mxu0
    %v1396 = vadd.f32 %v1204, %v1395
    %v1397 = vpop.f32.mrb[0].mxu0
    %1398 = vmatprep.mubr.bf16.mxu0 0
    %1399 = vmatmul.mubr.bf16.gmra.mrb[0].mxu0 %v1181
    %v1400 = vpop.f32.mrb[0].mxu0
    %v1401 = vadd.f32 %v1204, %v1400
    %v1402 = vpop.f32.mrb[0].mxu0
    %v1403 = vpop.f32.mrb[0].mxu0
    %v1404 = vadd.f32 %v1204, %v1403
    %v1405 = vpop.f32.mrb[0].mxu0
    %1406 = vmatprep.mubr.bf16.mxu0 0
    %1407 = vmatmul.mubr.bf16.gmra.mrb[0].mxu0 %v1182
    %v1408 = vpop.f32.mrb[0].mxu0
    %v1409 = vadd.f32 %v1204, %v1408
    %v1410 = vpop.f32.mrb[0].mxu0
    %v1411 = vpop.f32.mrb[0].mxu0
    %v1412 = vadd.f32 %v1204, %v1411
    %v1413 = vpop.f32.mrb[0].mxu0
    %1414 = vdwg.mxu0
    %1415 = vst [vmem:[#allocation6] sm:$0xff] %v1289
    %1416 = vst [vmem:[#allocation6 + $0x8] sm:$0xff] %v1292
    %1417 = vst [vmem:[#allocation6 + $0x10] sm:$0xff] %v1297
    %1418 = vst [vmem:[#allocation6 + $0x18] sm:$0xff] %v1300
    %1419 = vst [vmem:[#allocation6 + $0x20] sm:$0xff] %v1305
    %1420 = vst [vmem:[#allocation6 + $0x28] sm:$0xff] %v1308
    %1421 = vst [vmem:[#allocation6 + $0x30] sm:$0xff] %v1313
    %1422 = vst [vmem:[#allocation6 + $0x38] sm:$0xff] %v1316
    %1423 = vst [vmem:[#allocation6 + $0x40] sm:$0xff] %v1321
    %1424 = vst [vmem:[#allocation6 + $0x48] sm:$0xff] %v1324
    %1425 = vst [vmem:[#allocation6 + $0x50] sm:$0xff] %v1329
    %1426 = vst [vmem:[#allocation6 + $0x58] sm:$0xff] %v1332
    %1427 = vst [vmem:[#allocation6 + $0x60] sm:$0xff] %v1337
    %1428 = vst [vmem:[#allocation6 + $0x68] sm:$0xff] %v1340
    %1429 = vst [vmem:[#allocation6 + $0x70] sm:$0xff] %v1345
    %1430 = vst [vmem:[#allocation6 + $0x78] sm:$0xff] %v1348
    %1431 = vst [vmem:[#allocation6 + $0x80] sm:$0xff] %v1353
    %1432 = vst [vmem:[#allocation6 + $0x88] sm:$0xff] %v1356
    %1433 = vst [vmem:[#allocation6 + $0x90] sm:$0xff] %v1361
    %1434 = vst [vmem:[#allocation6 + $0x98] sm:$0xff] %v1364
    %1435 = vst [vmem:[#allocation6 + $0xa0] sm:$0xff] %v1369
    %1436 = vst [vmem:[#allocation6 + $0xa8] sm:$0xff] %v1372
    %1437 = vst [vmem:[#allocation6 + $0xb0] sm:$0xff] %v1377
    %1438 = vst [vmem:[#allocation6 + $0xb8] sm:$0xff] %v1380
    %1439 = vst [vmem:[#allocation6 + $0xc0] sm:$0xff] %v1385
    %1440 = vst [vmem:[#allocation6 + $0xc8] sm:$0xff] %v1388
    %1441 = vst [vmem:[#allocation6 + $0xd0] sm:$0xff] %v1393
    %1442 = vst [vmem:[#allocation6 + $0xd8] sm:$0xff] %v1396
    %1443 = vst [vmem:[#allocation6 + $0xe0] sm:$0xff] %v1401
    %1444 = vst [vmem:[#allocation6 + $0xe8] sm:$0xff] %v1404
    %1445 = vst [vmem:[#allocation6 + $0xf0] sm:$0xff] %v1409
    %1446 = vst [vmem:[#allocation6 + $0xf8] sm:$0xff] %v1412
    // Predicated region
    $region34: #{tpu_custom_call.1} parent=1 // pred_check
      _
    $region35: #{tpu_custom_call.1} parent=1 // pred_check_branch
      %1448 = sbr.rel (0) target = $region37
    $region36: #{tpu_custom_call.1} parent=1 // pred_region
      %s1450 = ssub.s32 4096, 4096
      %1451 = vsyncadd [#allocation5], %s1450
      %s1452 = sshll.u32 [#allocation6], 4
      %s1453 = int_to_ptr.vmem [resolvable:$true] %s1452
      %1458 = dma.vmem_to_hbm [thread:$0]  %s1453, 4096, %s7, [#allocation5], 128, 128, 8
    $region37: #{tpu_custom_call.1} parent=1 // pred_fallthru
      _
    // Predicated region
    $region38: #{tpu_custom_call.1} parent=1 // pred_check
      _
    $region39: #{tpu_custom_call.1} parent=1 // pred_check_branch
      %1460 = sbr.rel (0) target = $region41
    $region40: #{tpu_custom_call.1} parent=1 // pred_region
      %1461 = dma.done [#allocation5], 4096
    $region41: #{tpu_custom_call.1} parent=1 // pred_fallthru
      _
    %1462 = vsyncpa [#allocation4], 1
    %1463 = vsyncpa [#allocation5], 1

</llo_original>
